<compile_context>
chip_gen: v5e
topology: v5e:2x2
jax: 0.10.0
libtpu: 0.0.40
codegen_flags: <defaults>
</compile_context>

<pallas_src>
import functools
import numpy as np
import jax
import jax.numpy as jnp
from jax.experimental import pallas as pl
from jax.experimental.pallas import tpu as pltpu


# --------------------- fully fused per-graph kernel: GRU steps + readout + MLP
def _model_kernel(len_ref, x_ref, adj_ref, wax_ref, ba_ref, wh1_ref,
                  wae_ref, bae_ref, wmlp_ref, bmlp_ref, o_ref, *, hid_dim, step):
    H = hid_dim
    b = pl.program_id(0)

    x = x_ref[0]                         # (L, H) encoded node features (f32)
    adj = adj_ref[0]                     # (L, L) this graph's adjacency (bf16)
    L = x.shape[0]
    wax = wax_ref[...]                   # (2H, GW) merged gate weights (bf16)
    wh1 = wh1_ref[...]                   # (H, H) candidate weights (bf16)
    ba = jnp.broadcast_to(ba_ref[...], (L, ba_ref.shape[1]))   # hoisted bias

    def gru_step(_, x):
        xb = x.astype(jnp.bfloat16)
        # message passing: a[i] = sum_e edge_attr[e] * x[src[e]]  (block-diag)
        a = jnp.dot(adj, xb, preferred_element_type=jnp.float32)
        ax = jnp.concatenate([a.astype(jnp.bfloat16), xb], axis=1)   # (L, 2H)
        g = jnp.dot(ax, wax, preferred_element_type=jnp.float32) + ba
        z = jax.nn.sigmoid(g[:, 0:H])
        r = jax.nn.sigmoid(g[:, H:2 * H])
        h = jnp.tanh(g[:, 2 * H:3 * H]
                     + jnp.dot((x * r).astype(jnp.bfloat16), wh1,
                               preferred_element_type=jnp.float32))
        return h * z + x * (1.0 - z)

    x = jax.lax.fori_loop(0, step, gru_step, x, unroll=True)

    # readout: att & emb Linears fused into one (H, 1+H) matmul (kept f32; tiny)
    ae = jnp.dot(x, wae_ref[...], preferred_element_type=jnp.float32) + bae_ref[...]
    att = jax.nn.sigmoid(ae[:, 0:1])
    emb = jnp.tanh(ae[:, 1:])
    xe = att * emb                                                    # (L, H)

    n = len_ref[b]                                                    # real length
    row = jax.lax.broadcasted_iota(jnp.int32, xe.shape, 0)
    valid = row < n
    maskf = valid.astype(jnp.float32)
    mx = jnp.max(jnp.where(valid, xe, jnp.float32(-1e9)), axis=0, keepdims=True)
    denom = jnp.maximum(jnp.sum(maskf, axis=0, keepdims=True), 1.0)   # 0/0 guard
    mean = jnp.sum(xe * maskf, axis=0, keepdims=True) / denom
    pooled = mx + mean                                                # (1, H)

    # class projection fused in (dropout identity in eval)
    o_ref[0] = jnp.dot(pooled, wmlp_ref[...],
                       preferred_element_type=jnp.float32) + bmlp_ref[...]


def fused_forward(x0, adj_b, lengths, p, step):
    B, L, H = x0.shape
    GW = p['wax'].shape[1]
    C = p['wmlp'].shape[1]
    kernel = functools.partial(_model_kernel, hid_dim=H, step=step)

    flops = int(B * (step * (2 * L * L * H + 2 * L * (2 * H) * GW + 2 * L * H * H)
                     + 2 * L * H * (1 + H) + 2 * H * C))
    trans = int(B * (step * 3 * L * H + L * (1 + H)))
    bytes_acc = int(x0.size * 4 + adj_b.size * 2 + p['wax'].size * 2
                    + p['wh1'].size * 2 + p['ba'].size * 4 + p['wae'].size * 4
                    + p['bae'].size * 4 + p['wmlp'].size * 4 + p['bmlp'].size * 4
                    + B * C * 4 + B * 4)

    out = pl.pallas_call(
        kernel,
        grid_spec=pltpu.PrefetchScalarGridSpec(
            num_scalar_prefetch=1,                       # lengths -> SMEM
            grid=(B,),
            in_specs=[
                pl.BlockSpec((1, L, H), lambda b, lens: (b, 0, 0)),   # x0
                pl.BlockSpec((1, L, L), lambda b, lens: (b, 0, 0)),   # adj block
                pl.BlockSpec((2 * H, GW), lambda b, lens: (0, 0)),    # wax
                pl.BlockSpec((1, GW), lambda b, lens: (0, 0)),        # ba
                pl.BlockSpec((H, H), lambda b, lens: (0, 0)),         # wh1
                pl.BlockSpec((H, 1 + H), lambda b, lens: (0, 0)),     # wae
                pl.BlockSpec((1, 1 + H), lambda b, lens: (0, 0)),     # bae
                pl.BlockSpec((H, C), lambda b, lens: (0, 0)),         # wmlp
                pl.BlockSpec((1, C), lambda b, lens: (0, 0)),         # bmlp
            ],
            out_specs=pl.BlockSpec((1, 1, C), lambda b, lens: (b, 0, 0)),
        ),
        out_shape=jax.ShapeDtypeStruct((B, 1, C), jnp.float32),
        compiler_params=pltpu.CompilerParams(
            dimension_semantics=("parallel",)),          # megacore sharding
        cost_estimate=pl.CostEstimate(flops=flops, transcendentals=trans,
                                      bytes_accessed=bytes_acc),
    )(lengths, x0, adj_b, p['wax'], p['ba'], p['wh1'],
      p['wae'], p['bae'], p['wmlp'], p['bmlp'])
    return out[:, 0, :]


# ------------------------------------------------------------------- JAX glue
def pack_params(params):
    g = params['gru']
    r = params['read']
    H = params['enc_w'].shape[1]
    GW = ((3 * H + 127) // 128) * 128            # pad gate columns to 128 lanes
    wa = jnp.concatenate([g['wz0'], g['wr0'], g['wh0']], axis=1)           # (H,3H)
    wx = jnp.concatenate([g['wz1'], g['wr1'],
                          jnp.zeros((H, H), jnp.float32)], axis=1)          # (H,3H)
    wax = jnp.concatenate([wa, wx], axis=0)                                 # (2H,3H)
    wax = jnp.pad(wax, ((0, 0), (0, GW - 3 * H)))
    ba = jnp.concatenate([g['bz0'] + g['bz1'],
                          g['br0'] + g['br1'],
                          g['bh0'] + g['bh1']], axis=1)
    ba = jnp.pad(ba, ((0, 0), (0, GW - 3 * H)))
    return {
        # encode (Linear+tanh) folded into the embedding table, host-side once
        'enc_table': jnp.tanh(params['embed'] @ params['enc_w'] + params['enc_b']),
        'wax': wax.astype(jnp.bfloat16),
        'ba': ba,
        'wh1': g['wh1'].astype(jnp.bfloat16),
        'wae': jnp.concatenate([r['watt'], r['wemb']], axis=1),
        'bae': jnp.concatenate([r['batt'], r['bemb']], axis=1),
        'wmlp': r['wmlp'], 'bmlp': r['bmlp'],
    }


def model_forward(packed, node_ids_pad, adj_b, lengths, step):
    B, L = adj_b.shape[0], adj_b.shape[1]
    H = packed['enc_table'].shape[1]
    x0 = jnp.take(packed['enc_table'], node_ids_pad, axis=0).reshape(B, L, H)
    lens = jnp.asarray(np.asarray(lengths, np.int32))
    return fused_forward(x0, adj_b.astype(jnp.bfloat16), lens, packed, step)


# ---------------------------------------------------------- pure-JAX reference
def reference_forward(params, node_ids_pad, adj_b, lengths, step):
    B, L = adj_b.shape[0], adj_b.shape[1]
    x = params['embed'][node_ids_pad].reshape(B, L, -1)
    x = jnp.tanh(x @ params['enc_w'] + params['enc_b'])
    g = params['gru']
    for _ in range(step):
        a = jnp.einsum('bij,bjd->bid', adj_b, x)
        z = jax.nn.sigmoid(a @ g['wz0'] + g['bz0'] + x @ g['wz1'] + g['bz1'])
        r = jax.nn.sigmoid(a @ g['wr0'] + g['br0'] + x @ g['wr1'] + g['br1'])
        h = jnp.tanh(a @ g['wh0'] + g['bh0'] + (x * r) @ g['wh1'] + g['bh1'])
        x = h * z + x * (1.0 - z)
    r_ = params['read']
    mask = (np.arange(L)[None, :, None]
            < np.asarray(lengths)[:, None, None]).astype(np.float32)
    mask = jnp.asarray(mask)
    att = jax.nn.sigmoid(x @ r_['watt'] + r_['batt'])
    emb = jnp.tanh(x @ r_['wemb'] + r_['bemb'])
    xe = att * emb
    mx = jnp.max(xe + (mask - 1.0) * 1e9, axis=1)
    mean = jnp.sum(xe * mask, axis=1) / jnp.sum(mask, axis=1)
    return (mx + mean) @ r_['wmlp'] + r_['bmlp']


# ------------------------------------------------------------------ init utils
def xavier_uniform(key, fan_in, fan_out):
    a = float(np.sqrt(6.0 / (fan_in + fan_out)))
    return jax.random.uniform(key, (fan_in, fan_out), jnp.float32, -a, a)


if __name__ == "__main__":
    NUM_WORDS, NUM_CLASSES = 50, 4
    IN_DIM, HID_DIM, STEP = 32, 32, 2

    key = jax.random.PRNGKey(0)
    ks = jax.random.split(key, 16)

    # embedding table (num_words+1, in_dim); padding_idx row zeroed
    embed = jax.random.normal(ks[0], (NUM_WORDS + 1, IN_DIM), jnp.float32)
    embed = embed.at[NUM_WORDS].set(0.0)

    params = {
        'embed': embed,
        'enc_w': xavier_uniform(ks[1], IN_DIM, HID_DIM),
        'enc_b': jnp.zeros((1, HID_DIM), jnp.float32),
        'gru': {
            'wz0': xavier_uniform(ks[2], HID_DIM, HID_DIM), 'bz0': jnp.zeros((1, HID_DIM), jnp.float32),
            'wz1': xavier_uniform(ks[3], HID_DIM, HID_DIM), 'bz1': jnp.zeros((1, HID_DIM), jnp.float32),
            'wr0': xavier_uniform(ks[4], HID_DIM, HID_DIM), 'br0': jnp.zeros((1, HID_DIM), jnp.float32),
            'wr1': xavier_uniform(ks[5], HID_DIM, HID_DIM), 'br1': jnp.zeros((1, HID_DIM), jnp.float32),
            'wh0': xavier_uniform(ks[6], HID_DIM, HID_DIM), 'bh0': jnp.zeros((1, HID_DIM), jnp.float32),
            'wh1': xavier_uniform(ks[7], HID_DIM, HID_DIM), 'bh1': jnp.zeros((1, HID_DIM), jnp.float32),
        },
        'read': {
            'watt': xavier_uniform(ks[8], HID_DIM, 1), 'batt': jnp.zeros((1, 1), jnp.float32),
            'wemb': xavier_uniform(ks[9], HID_DIM, HID_DIM), 'bemb': jnp.zeros((1, HID_DIM), jnp.float32),
            'wmlp': xavier_uniform(ks[10], HID_DIM, NUM_CLASSES), 'bmlp': jnp.zeros((1, NUM_CLASSES), jnp.float32),
        },
    }

    # small synthetic batch: 2 graphs with 5 and 3 nodes (packed node ids 0..7)
    lengths = [5, 3]
    B = len(lengths)
    N = sum(lengths)
    L_PAD = -(-max(lengths) // 8) * 8          # round up to sublane multiple

    node_ids = np.asarray(jax.random.randint(ks[11], (N,), 0, NUM_WORDS), np.int32)
    src = np.array([0, 1, 2, 3, 4, 0, 2, 5, 6, 7, 5], np.int32)
    dst = np.array([1, 2, 3, 4, 0, 2, 0, 6, 7, 5, 7], np.int32)
    edge_attr = np.asarray(jax.random.uniform(ks[12], (src.shape[0],), jnp.float32, 0.1, 1.0))

    # remap packed node indices -> per-graph local indices, padded layout
    offs = np.concatenate([[0], np.cumsum(lengths)]).astype(np.int32)
    graph_of = np.zeros((N,), np.int32)
    local_of = np.zeros((N,), np.int32)
    node_ids_pad = np.full((B * L_PAD,), NUM_WORDS, np.int32)   # pad rows -> padding idx
    for b, l in enumerate(lengths):
        graph_of[offs[b]:offs[b] + l] = b
        local_of[offs[b]:offs[b] + l] = np.arange(l, dtype=np.int32)
        node_ids_pad[b * L_PAD: b * L_PAD + l] = node_ids[offs[b]:offs[b] + l]

    # block-diagonal adjacency, stored per graph: adj[b, dst_local, src_local] = edge_attr
    adj_np = np.zeros((B, L_PAD, L_PAD), np.float32)
    for e in range(src.shape[0]):
        assert graph_of[src[e]] == graph_of[dst[e]]
        adj_np[graph_of[dst[e]], local_of[dst[e]], local_of[src[e]]] += edge_attr[e]
    adj_b = jnp.asarray(adj_np)
    node_ids_pad = jnp.asarray(node_ids_pad)

    packed = pack_params(params)

    out = model_forward(packed, node_ids_pad, adj_b, lengths, STEP)
    out = jax.block_until_ready(out)

    ref = reference_forward(params, node_ids_pad, adj_b, lengths, STEP)
    assert out.shape == (B, NUM_CLASSES)
    assert np.allclose(np.asarray(out), np.asarray(ref), atol=5e-2, rtol=5e-2), (
        float(np.max(np.abs(np.asarray(out) - np.asarray(ref)))))

    print("KERNEL_OK")
</pallas_src>

<mosaic_0001>
module attributes {stable_mosaic.version = 11 : i64} {
  func.func @_model_kernel(%arg0: i32, %arg1: memref<2xi32, #tpu.memory_space<smem>>, %arg2: memref<1x8x32xf32, #tpu.memory_space<vmem>>, %arg3: memref<1x8x8xbf16, #tpu.memory_space<vmem>>, %arg4: memref<64x128xbf16, #tpu.memory_space<vmem>>, %arg5: memref<1x128xf32, #tpu.memory_space<vmem>>, %arg6: memref<32x32xbf16, #tpu.memory_space<vmem>>, %arg7: memref<32x33xf32, #tpu.memory_space<vmem>>, %arg8: memref<1x33xf32, #tpu.memory_space<vmem>>, %arg9: memref<32x4xf32, #tpu.memory_space<vmem>>, %arg10: memref<1x4xf32, #tpu.memory_space<vmem>>, %arg11: memref<1x1x4xf32, #tpu.memory_space<vmem>>) attributes {dimension_semantics = [#tpu.dimension_semantics<parallel>], iteration_bounds = array<i64: 2>, scalar_prefetch = 1 : i64, scratch_operands = 0 : i64, tpu.core_type = #tpu.core_type<tc>, window_params = [{transform_indices = @transform_0, window_bounds = array<i64: 1, 8, 32>}, {transform_indices = @transform_1, window_bounds = array<i64: 1, 8, 8>}, {pipeline_mode = #tpu.pipeline_mode<synchronous>, transform_indices = @transform_2, window_bounds = array<i64: 64, 128>}, {pipeline_mode = #tpu.pipeline_mode<synchronous>, transform_indices = @transform_3, window_bounds = array<i64: 1, 128>}, {pipeline_mode = #tpu.pipeline_mode<synchronous>, transform_indices = @transform_4, window_bounds = array<i64: 32, 32>}, {pipeline_mode = #tpu.pipeline_mode<synchronous>, transform_indices = @transform_5, window_bounds = array<i64: 32, 33>}, {pipeline_mode = #tpu.pipeline_mode<synchronous>, transform_indices = @transform_6, window_bounds = array<i64: 1, 33>}, {pipeline_mode = #tpu.pipeline_mode<synchronous>, transform_indices = @transform_7, window_bounds = array<i64: 32, 4>}, {pipeline_mode = #tpu.pipeline_mode<synchronous>, transform_indices = @transform_8, window_bounds = array<i64: 1, 4>}, {transform_indices = @transform_9, window_bounds = array<i64: 1, 1, 4>}]} {
    %c0 = arith.constant 0 : index
    %c0_0 = arith.constant 0 : index
    %c0_1 = arith.constant 0 : index
    %0 = vector.load %arg2[%c0, %c0_0, %c0_1] : memref<1x8x32xf32, #tpu.memory_space<vmem>>, vector<1x8x32xf32>
    %1 = vector.shape_cast %0 : vector<1x8x32xf32> to vector<8x32xf32>
    %c0_2 = arith.constant 0 : index
    %c0_3 = arith.constant 0 : index
    %c0_4 = arith.constant 0 : index
    %2 = vector.load %arg3[%c0_2, %c0_3, %c0_4] : memref<1x8x8xbf16, #tpu.memory_space<vmem>>, vector<1x8x8xbf16>
    %3 = vector.shape_cast %2 : vector<1x8x8xbf16> to vector<8x8xbf16>
    %c0_5 = arith.constant 0 : index
    %c0_6 = arith.constant 0 : index
    %4 = vector.load %arg4[%c0_5, %c0_6] : memref<64x128xbf16, #tpu.memory_space<vmem>>, vector<64x128xbf16>
    %c0_7 = arith.constant 0 : index
    %c0_8 = arith.constant 0 : index
    %5 = vector.load %arg6[%c0_7, %c0_8] : memref<32x32xbf16, #tpu.memory_space<vmem>>, vector<32x32xbf16>
    %c0_9 = arith.constant 0 : index
    %c0_10 = arith.constant 0 : index
    %6 = vector.load %arg5[%c0_9, %c0_10] : memref<1x128xf32, #tpu.memory_space<vmem>>, vector<1x128xf32>
    %7 = vector.shape_cast %6 : vector<1x128xf32> to vector<1x128xf32>
    %8 = vector.broadcast %7 : vector<1x128xf32> to vector<8x128xf32>
    %c0_i32 = arith.constant 0 : i32
    %9 = arith.truncf %1 : vector<8x32xf32> to vector<8x32xbf16>
    %cst = arith.constant dense<0.000000e+00> : vector<8x32xf32>
    %10 = tpu.matmul %3, %9, %cst {dimension_numbers = #tpu.dot_dimension_numbers<[1], [0], [0], [1], [0, 0, 1, 1], [], []>} : vector<8x8xbf16>, vector<8x32xbf16>, vector<8x32xf32> -> vector<8x32xf32>
    %11 = arith.truncf %10 : vector<8x32xf32> to vector<8x32xbf16>
    %12 = tpu.concatenate %11, %9 in 1 : vector<8x32xbf16>, vector<8x32xbf16> -> vector<8x64xbf16>
    %cst_11 = arith.constant dense<0.000000e+00> : vector<8x128xf32>
    %13 = tpu.matmul %12, %4, %cst_11 {dimension_numbers = #tpu.dot_dimension_numbers<[1], [0], [0], [1], [0, 0, 1, 1], [], []>} : vector<8x64xbf16>, vector<64x128xbf16>, vector<8x128xf32> -> vector<8x128xf32>
    %14 = arith.addf %13, %8 : vector<8x128xf32>
    %15 = vector.extract_strided_slice %14 {offsets = [0, 0], sizes = [8, 32], strides = [1, 1]} : vector<8x128xf32> to vector<8x32xf32>
    %16 = arith.negf %15 : vector<8x32xf32>
    %17 = math.exp %16 : vector<8x32xf32>
    %cst_12 = arith.constant 1.000000e+00 : f32
    %18 = vector.broadcast %cst_12 : f32 to vector<8x32xf32>
    %19 = arith.addf %18, %17 : vector<8x32xf32>
    %20 = arith.divf %18, %19 : vector<8x32xf32>
    %21 = vector.extract_strided_slice %14 {offsets = [0, 32], sizes = [8, 32], strides = [1, 1]} : vector<8x128xf32> to vector<8x32xf32>
    %22 = arith.negf %21 : vector<8x32xf32>
    %23 = math.exp %22 : vector<8x32xf32>
    %cst_13 = arith.constant 1.000000e+00 : f32
    %24 = vector.broadcast %cst_13 : f32 to vector<8x32xf32>
    %25 = arith.addf %24, %23 : vector<8x32xf32>
    %26 = arith.divf %24, %25 : vector<8x32xf32>
    %27 = vector.extract_strided_slice %14 {offsets = [0, 64], sizes = [8, 32], strides = [1, 1]} : vector<8x128xf32> to vector<8x32xf32>
    %28 = arith.mulf %1, %26 : vector<8x32xf32>
    %29 = arith.truncf %28 : vector<8x32xf32> to vector<8x32xbf16>
    %cst_14 = arith.constant dense<0.000000e+00> : vector<8x32xf32>
    %30 = tpu.matmul %29, %5, %cst_14 {dimension_numbers = #tpu.dot_dimension_numbers<[1], [0], [0], [1], [0, 0, 1, 1], [], []>} : vector<8x32xbf16>, vector<32x32xbf16>, vector<8x32xf32> -> vector<8x32xf32>
    %31 = arith.addf %27, %30 : vector<8x32xf32>
    %32 = math.tanh %31 : vector<8x32xf32>
    %33 = arith.mulf %32, %20 : vector<8x32xf32>
    %cst_15 = arith.constant 1.000000e+00 : f32
    %34 = vector.broadcast %cst_15 : f32 to vector<8x32xf32>
    %35 = arith.subf %34, %20 : vector<8x32xf32>
    %36 = arith.mulf %1, %35 : vector<8x32xf32>
    %37 = arith.addf %33, %36 : vector<8x32xf32>
    %c1_i32 = arith.constant 1 : i32
    %38 = arith.truncf %37 : vector<8x32xf32> to vector<8x32xbf16>
    %cst_16 = arith.constant dense<0.000000e+00> : vector<8x32xf32>
    %39 = tpu.matmul %3, %38, %cst_16 {dimension_numbers = #tpu.dot_dimension_numbers<[1], [0], [0], [1], [0, 0, 1, 1], [], []>} : vector<8x8xbf16>, vector<8x32xbf16>, vector<8x32xf32> -> vector<8x32xf32>
    %40 = arith.truncf %39 : vector<8x32xf32> to vector<8x32xbf16>
    %41 = tpu.concatenate %40, %38 in 1 : vector<8x32xbf16>, vector<8x32xbf16> -> vector<8x64xbf16>
    %cst_17 = arith.constant dense<0.000000e+00> : vector<8x128xf32>
    %42 = tpu.matmul %41, %4, %cst_17 {dimension_numbers = #tpu.dot_dimension_numbers<[1], [0], [0], [1], [0, 0, 1, 1], [], []>} : vector<8x64xbf16>, vector<64x128xbf16>, vector<8x128xf32> -> vector<8x128xf32>
    %43 = arith.addf %42, %8 : vector<8x128xf32>
    %44 = vector.extract_strided_slice %43 {offsets = [0, 0], sizes = [8, 32], strides = [1, 1]} : vector<8x128xf32> to vector<8x32xf32>
    %45 = arith.negf %44 : vector<8x32xf32>
    %46 = math.exp %45 : vector<8x32xf32>
    %cst_18 = arith.constant 1.000000e+00 : f32
    %47 = vector.broadcast %cst_18 : f32 to vector<8x32xf32>
    %48 = arith.addf %47, %46 : vector<8x32xf32>
    %49 = arith.divf %47, %48 : vector<8x32xf32>
    %50 = vector.extract_strided_slice %43 {offsets = [0, 32], sizes = [8, 32], strides = [1, 1]} : vector<8x128xf32> to vector<8x32xf32>
    %51 = arith.negf %50 : vector<8x32xf32>
    %52 = math.exp %51 : vector<8x32xf32>
    %cst_19 = arith.constant 1.000000e+00 : f32
    %53 = vector.broadcast %cst_19 : f32 to vector<8x32xf32>
    %54 = arith.addf %53, %52 : vector<8x32xf32>
    %55 = arith.divf %53, %54 : vector<8x32xf32>
    %56 = vector.extract_strided_slice %43 {offsets = [0, 64], sizes = [8, 32], strides = [1, 1]} : vector<8x128xf32> to vector<8x32xf32>
    %57 = arith.mulf %37, %55 : vector<8x32xf32>
    %58 = arith.truncf %57 : vector<8x32xf32> to vector<8x32xbf16>
    %cst_20 = arith.constant dense<0.000000e+00> : vector<8x32xf32>
    %59 = tpu.matmul %58, %5, %cst_20 {dimension_numbers = #tpu.dot_dimension_numbers<[1], [0], [0], [1], [0, 0, 1, 1], [], []>} : vector<8x32xbf16>, vector<32x32xbf16>, vector<8x32xf32> -> vector<8x32xf32>
    %60 = arith.addf %56, %59 : vector<8x32xf32>
    %61 = math.tanh %60 : vector<8x32xf32>
    %62 = arith.mulf %61, %49 : vector<8x32xf32>
    %cst_21 = arith.constant 1.000000e+00 : f32
    %63 = vector.broadcast %cst_21 : f32 to vector<8x32xf32>
    %64 = arith.subf %63, %49 : vector<8x32xf32>
    %65 = arith.mulf %37, %64 : vector<8x32xf32>
    %66 = arith.addf %62, %65 : vector<8x32xf32>
    %c0_22 = arith.constant 0 : index
    %c0_23 = arith.constant 0 : index
    %67 = vector.load %arg7[%c0_22, %c0_23] : memref<32x33xf32, #tpu.memory_space<vmem>>, vector<32x33xf32>
    %cst_24 = arith.constant dense<0.000000e+00> : vector<8x33xf32>
    %68 = tpu.matmul %66, %67, %cst_24 {dimension_numbers = #tpu.dot_dimension_numbers<[1], [0], [0], [1], [0, 0, 1, 1], [], []>} : vector<8x32xf32>, vector<32x33xf32>, vector<8x33xf32> -> vector<8x33xf32>
    %c0_25 = arith.constant 0 : index
    %c0_26 = arith.constant 0 : index
    %69 = vector.load %arg8[%c0_25, %c0_26] : memref<1x33xf32, #tpu.memory_space<vmem>>, vector<1x33xf32>
    %70 = vector.broadcast %69 : vector<1x33xf32> to vector<8x33xf32>
    %71 = arith.addf %68, %70 : vector<8x33xf32>
    %72 = vector.extract_strided_slice %71 {offsets = [0, 0], sizes = [8, 1], strides = [1, 1]} : vector<8x33xf32> to vector<8x1xf32>
    %73 = arith.negf %72 : vector<8x1xf32>
    %74 = math.exp %73 : vector<8x1xf32>
    %cst_27 = arith.constant 1.000000e+00 : f32
    %75 = vector.broadcast %cst_27 : f32 to vector<8x1xf32>
    %76 = arith.addf %75, %74 : vector<8x1xf32>
    %77 = arith.divf %75, %76 : vector<8x1xf32>
    %78 = vector.extract_strided_slice %71 {offsets = [0, 1], sizes = [8, 32], strides = [1, 1]} : vector<8x33xf32> to vector<8x32xf32>
    %79 = math.tanh %78 : vector<8x32xf32>
    %80 = vector.broadcast %77 : vector<8x1xf32> to vector<8x32xf32>
    %81 = arith.mulf %80, %79 : vector<8x32xf32>
    %82 = arith.index_cast %arg0 : i32 to index
    %83 = memref.load %arg1[%82] : memref<2xi32, #tpu.memory_space<smem>>
    %84 = tpu.iota {dimensions = array<i32: 0>} : vector<8x32xi32>
    %85 = vector.broadcast %83 : i32 to vector<8x32xi32>
    %86 = arith.cmpi slt, %84, %85 : vector<8x32xi32>
    %87 = arith.extui %86 : vector<8x32xi1> to vector<8x32xi32>
    %88 = arith.sitofp %87 : vector<8x32xi32> to vector<8x32xf32>
    %cst_28 = arith.constant -1.000000e+09 : f32
    %89 = vector.broadcast %cst_28 : f32 to vector<8x32xf32>
    %90 = arith.select %86, %81, %89 : vector<8x32xi1>, vector<8x32xf32>
    %cst_29 = arith.constant dense<0xFF800000> : vector<32xf32>
    %91 = vector.multi_reduction <maximumf>, %90, %cst_29 [0] : vector<8x32xf32> to vector<32xf32>
    %92 = vector.shape_cast %91 : vector<32xf32> to vector<1x32xf32>
    %cst_30 = arith.constant dense<0.000000e+00> : vector<32xf32>
    %93 = vector.multi_reduction <add>, %88, %cst_30 [0] : vector<8x32xf32> to vector<32xf32>
    %94 = vector.shape_cast %93 : vector<32xf32> to vector<1x32xf32>
    %cst_31 = arith.constant 1.000000e+00 : f32
    %95 = vector.broadcast %cst_31 : f32 to vector<1x32xf32>
    %96 = arith.maximumf %94, %95 : vector<1x32xf32>
    %97 = arith.mulf %81, %88 : vector<8x32xf32>
    %cst_32 = arith.constant dense<0.000000e+00> : vector<32xf32>
    %98 = vector.multi_reduction <add>, %97, %cst_32 [0] : vector<8x32xf32> to vector<32xf32>
    %99 = vector.shape_cast %98 : vector<32xf32> to vector<1x32xf32>
    %100 = arith.divf %99, %96 : vector<1x32xf32>
    %101 = arith.addf %92, %100 : vector<1x32xf32>
    %c0_33 = arith.constant 0 : index
    %c0_34 = arith.constant 0 : index
    %102 = vector.load %arg9[%c0_33, %c0_34] : memref<32x4xf32, #tpu.memory_space<vmem>>, vector<32x4xf32>
    %cst_35 = arith.constant dense<0.000000e+00> : vector<1x4xf32>
    %103 = tpu.matmul %101, %102, %cst_35 {dimension_numbers = #tpu.dot_dimension_numbers<[1], [0], [0], [1], [0, 0, 1, 1], [], []>} : vector<1x32xf32>, vector<32x4xf32>, vector<1x4xf32> -> vector<1x4xf32>
    %c0_36 = arith.constant 0 : index
    %c0_37 = arith.constant 0 : index
    %104 = vector.load %arg10[%c0_36, %c0_37] : memref<1x4xf32, #tpu.memory_space<vmem>>, vector<1x4xf32>
    %105 = arith.addf %103, %104 : vector<1x4xf32>
    %c0_38 = arith.constant 0 : index
    %c0_39 = arith.constant 0 : index
    %c0_40 = arith.constant 0 : index
    %106 = vector.load %arg11[%c0_38, %c0_39, %c0_40] : memref<1x1x4xf32, #tpu.memory_space<vmem>>, vector<1x1x4xf32>
    %107 = vector.shape_cast %106 : vector<1x1x4xf32> to vector<1x4xf32>
    %108 = vector.shape_cast %105 : vector<1x4xf32> to vector<1x1x4xf32>
    tpu.vector_store %arg11[%c0_38, %c0_39, %c0_40], %108 {strides = array<i32>} : memref<1x1x4xf32, #tpu.memory_space<vmem>>, vector<1x1x4xf32>,
    return
  }
  func.func @transform_0(%arg0: i32, %arg1: memref<2xi32, #tpu.memory_space<smem>>) -> (i32, i32, i32) {
    %c0_i32 = arith.constant 0 : i32
    %c0_i32_0 = arith.constant 0 : i32
    %c0_i32_1 = arith.constant 0 : i32
    return %arg0, %c0_i32, %c0_i32_0 : i32, i32, i32
  }
  func.func @transform_1(%arg0: i32, %arg1: memref<2xi32, #tpu.memory_space<smem>>) -> (i32, i32, i32) {
    %c0_i32 = arith.constant 0 : i32
    %c0_i32_0 = arith.constant 0 : i32
    %c0_i32_1 = arith.constant 0 : i32
    return %arg0, %c0_i32, %c0_i32_0 : i32, i32, i32
  }
  func.func @transform_2(%arg0: i32, %arg1: memref<2xi32, #tpu.memory_space<smem>>) -> (i32, i32) {
    %c0_i32 = arith.constant 0 : i32
    %c0_i32_0 = arith.constant 0 : i32
    %c0_i32_1 = arith.constant 0 : i32
    return %c0_i32, %c0_i32_0 : i32, i32
  }
  func.func @transform_3(%arg0: i32, %arg1: memref<2xi32, #tpu.memory_space<smem>>) -> (i32, i32) {
    %c0_i32 = arith.constant 0 : i32
    %c0_i32_0 = arith.constant 0 : i32
    %c0_i32_1 = arith.constant 0 : i32
    return %c0_i32, %c0_i32_0 : i32, i32
  }
  func.func @transform_4(%arg0: i32, %arg1: memref<2xi32, #tpu.memory_space<smem>>) -> (i32, i32) {
    %c0_i32 = arith.constant 0 : i32
    %c0_i32_0 = arith.constant 0 : i32
    %c0_i32_1 = arith.constant 0 : i32
    return %c0_i32, %c0_i32_0 : i32, i32
  }
  func.func @transform_5(%arg0: i32, %arg1: memref<2xi32, #tpu.memory_space<smem>>) -> (i32, i32) {
    %c0_i32 = arith.constant 0 : i32
    %c0_i32_0 = arith.constant 0 : i32
    %c0_i32_1 = arith.constant 0 : i32
    return %c0_i32, %c0_i32_0 : i32, i32
  }
  func.func @transform_6(%arg0: i32, %arg1: memref<2xi32, #tpu.memory_space<smem>>) -> (i32, i32) {
    %c0_i32 = arith.constant 0 : i32
    %c0_i32_0 = arith.constant 0 : i32
    %c0_i32_1 = arith.constant 0 : i32
    return %c0_i32, %c0_i32_0 : i32, i32
  }
  func.func @transform_7(%arg0: i32, %arg1: memref<2xi32, #tpu.memory_space<smem>>) -> (i32, i32) {
    %c0_i32 = arith.constant 0 : i32
    %c0_i32_0 = arith.constant 0 : i32
    %c0_i32_1 = arith.constant 0 : i32
    return %c0_i32, %c0_i32_0 : i32, i32
  }
  func.func @transform_8(%arg0: i32, %arg1: memref<2xi32, #tpu.memory_space<smem>>) -> (i32, i32) {
    %c0_i32 = arith.constant 0 : i32
    %c0_i32_0 = arith.constant 0 : i32
    %c0_i32_1 = arith.constant 0 : i32
    return %c0_i32, %c0_i32_0 : i32, i32
  }
  func.func @transform_9(%arg0: i32, %arg1: memref<2xi32, #tpu.memory_space<smem>>) -> (i32, i32, i32) {
    %c0_i32 = arith.constant 0 : i32
    %c0_i32_0 = arith.constant 0 : i32
    %c0_i32_1 = arith.constant 0 : i32
    return %arg0, %c0_i32, %c0_i32_0 : i32, i32, i32
  }
}

</mosaic_0001>

<llo_original>
// kernel: tpu_custom_call.1
$region0: #{tpu_custom_call.1}
  #allocation0 [shape = 'u32[]', space=smem, size = 0x4, offset = 0x4, fixed_abs, tag = 'smem constant byte address 0x4 - core index']
  #allocation1 [shape = 'u32[72,128]{1,0:T(1,128)}', space=vmem, size = 0x9000, scoped, tag = 'internal scratch']
  #allocation2 [shape = 's32[1]{0}', space=sflag, size = 0x4, scoped, tag = 'scoped memory for tpu_custom_call.1']
  #allocation3 [shape = 'u8[512]{0}', space=smem, size = 0x200, scoped, tag = 'prefetched SMEM operand 0']
  %s0 = inlined_call_operand.vmem [shape: s32[2], index: 0, kind: input, shape index: {}]
  %s1 = inlined_call_operand.hbm [shape: f32[2,8,32], index: 1, kind: input, shape index: {}]
  %s2 = inlined_call_operand.hbm [shape: bf16[2,8,8], index: 2, kind: input, shape index: {}]
  %s3 = inlined_call_operand.vmem [shape: bf16[64,128], index: 3, kind: input, shape index: {}]
  %s4 = inlined_call_operand.vmem [shape: f32[1,128], index: 4, kind: input, shape index: {}]
  %s5 = inlined_call_operand.hbm [shape: bf16[32,32], index: 5, kind: input, shape index: {}]
  %s6 = inlined_call_operand.hbm [shape: f32[32,33], index: 6, kind: input, shape index: {}]
  %s7 = inlined_call_operand.vmem [shape: f32[1,33], index: 7, kind: input, shape index: {}]
  %s8 = inlined_call_operand.vmem [shape: f32[32,4], index: 8, kind: input, shape index: {}]
  %s9 = inlined_call_operand.vmem [shape: f32[1,4], index: 9, kind: input, shape index: {}]
  %s10 = inlined_call_operand.hbm [shape: f32[2,1,4], index: 10, kind: output, shape index: {}]
  %s11 = sld [smem:[#allocation0]]
  $region85: #{tpu_custom_call.1} parent=0
    _
  %s13 = ssub.s32 1, %s11
  %s14 = scalar_select 0, %s13, %s11
  %s16 = sshll.u32 %s0, 4
  %s17 = int_to_ptr.vmem [resolvable:$true] %s16
  %19 = dma.vmem_to_smem %s17, 16, [#allocation3], [#allocation2]
  %21 = dma.done [#allocation2], 16
  %22 = sfence
  $region1: #{tpu_custom_call.1} parent=0
    #allocation4 [shape = 'u8[8192]{0}', space=vmem, size = 0x2000, scoped, tag = 'input window, operand 1']
    #allocation5 [shape = 's32[2]{0}', space=sflag, size = 0x8, scoped, tag = 'scoped memory for tpu_custom_call.1']
    #allocation6 [shape = 's32[2]{0}', space=sflag, size = 0x8, scoped, tag = 'scoped memory for tpu_custom_call.1']
    #allocation7 [shape = 'u8[4096]{0}', space=vmem, size = 0x1000, scoped, tag = 'input window, operand 2']
    #allocation8 [shape = 's32[2]{0}', space=sflag, size = 0x8, scoped, tag = 'scoped memory for tpu_custom_call.1']
    #allocation9 [shape = 'u8[8192]{0}', space=vmem, size = 0x2000, scoped, tag = 'input window, operand 5, single buffered']
    #allocation10 [shape = 'u8[16384]{0}', space=vmem, size = 0x4000, scoped, tag = 'input window, operand 6, single buffered']
    #allocation11 [shape = 's32[1]{0}', space=sflag, size = 0x4, scoped, tag = 'scoped memory for tpu_custom_call.1']
    #allocation12 [shape = 'u8[1024]{0}', space=vmem, size = 0x400, scoped, tag = 'output window, operand 0']
    %23 = vsyncpa [#allocation5], 0
    %s24 = scalar_lea.sflag [#allocation5], 1
    %25 = vsyncpa %s24, 0
    %26 = vsyncpa [#allocation8], 0
    %s27 = scalar_lea.sflag [#allocation8], 1
    %28 = vsyncpa %s27, 0
    %29 = vsyncpa [#allocation11], 0
    %30 = vsyncpa [#allocation6], 0
    %s31 = scalar_lea.sflag [#allocation6], 1
    %32 = vsyncpa %s31, 0
    loop: start=0, step=1, limit=4
    $region2: #{tpu_custom_call.1} parent=1 // loop_pre_header
      _
    $region3: #{tpu_custom_call.1} parent=1 // loop_header
      %s34 = sphi 0, %s38
      %p35 = scmp.ge.s32.totalorder %s34, 4
      %s44 = sphi 0, %s46
      %s47 = sphi 0, %s44
      %s48 = sphi 0, %s47
      %s64 = sphi 0, %s48
      %s70 = sphi 0, %s72
      %s73 = sphi 0, %s70
      %s74 = sphi 0, %s73
      %s90 = sphi 0, %s74
      %s94 = sphi 0, %s94
      %s96 = sphi 0, %s94
      %s97 = sphi 0, %s96
      %s111 = sphi 0, %s97
      %s115 = sphi 0, %s115
      %s117 = sphi 0, %s115
      %s118 = sphi 0, %s117
      %s132 = sphi 0, %s118
      %s136 = sphi 0, %s136
      %s138 = sphi 0, %s136
      %s139 = sphi 0, %s138
      %s153 = sphi 0, %s139
      %s157 = sphi 0, %s157
      %s159 = sphi 0, %s157
      %s160 = sphi 0, %s159
      %s174 = sphi 0, %s160
      %s178 = sphi 0, %s178
      %s180 = sphi 0, %s178
      %s181 = sphi 0, %s180
      %s195 = sphi 0, %s181
      %s199 = sphi 0, %s199
      %s201 = sphi 0, %s199
      %s202 = sphi 0, %s201
      %s216 = sphi 0, %s202
      %s220 = sphi 0, %s220
      %s222 = sphi 0, %s220
      %s223 = sphi 0, %s222
      %s237 = sphi 0, %s223
      %s243 = sphi 0, %s245
      %s246 = sphi 0, %s243
      %s247 = sphi 0, %s246
      %s263 = sphi 0, %s247
    $region4: #{tpu_custom_call.1} parent=1 // loop_header_branch
      %37 = sbr.rel (%p35) target = $region8
    $region5: #{tpu_custom_call.1} parent=1 // loop_body
      %s39 = ssub.s32 %s34, 1
      %s40 = ssub.s32 %s34, 2
      %s41 = sadd.s32 %s34, 1
      %s42 = ssub.s32 %s34, %s41
      %p43 = scmp.eq.s32.totalorder %s42, 0
      %s45 = sadd.s32 %s44, 1
      %s46 = scalar_select %p43, %s44, %s45
      %p49 = pneg %p43
      %p50 = scmp.eq.s32.totalorder %s34, 1
      %p51 = por %p49, %p50
      %p52 = scmp.ne.s32.totalorder %s44, %s47
      %p53 = scmp.eq.s32.totalorder %s34, 0
      %p54 = por %p52, %p53
      %p55 = scmp.ne.s32.totalorder %s44, %s47
      %p56 = scmp.eq.s32.totalorder %s39, 1
      %p57 = por %p55, %p56
      %p58 = scmp.ne.s32.totalorder %s47, %s48
      %p59 = scmp.eq.s32.totalorder %s39, 0
      %p60 = por %p58, %p59
      %p61 = scmp.ne.s32.totalorder %s47, %s48
      %p62 = scmp.eq.s32.totalorder %s40, 1
      %p63 = por %p61, %p62
      %p65 = scmp.ne.s32.totalorder %s48, %s64
      %p66 = scmp.eq.s32.totalorder %s40, 0
      %p67 = por %p65, %p66
      %s68 = ssub.s32 %s34, %s41
      %p69 = scmp.eq.s32.totalorder %s68, 0
      %s71 = sadd.s32 %s70, 1
      %s72 = scalar_select %p69, %s70, %s71
      %p75 = pneg %p69
      %p76 = scmp.eq.s32.totalorder %s34, 1
      %p77 = por %p75, %p76
      %p78 = scmp.ne.s32.totalorder %s70, %s73
      %p79 = scmp.eq.s32.totalorder %s34, 0
      %p80 = por %p78, %p79
      %p81 = scmp.ne.s32.totalorder %s70, %s73
      %p82 = scmp.eq.s32.totalorder %s39, 1
      %p83 = por %p81, %p82
      %p84 = scmp.ne.s32.totalorder %s73, %s74
      %p85 = scmp.eq.s32.totalorder %s39, 0
      %p86 = por %p84, %p85
      %p87 = scmp.ne.s32.totalorder %s73, %s74
      %p88 = scmp.eq.s32.totalorder %s40, 1
      %p89 = por %p87, %p88
      %p91 = scmp.ne.s32.totalorder %s74, %s90
      %p92 = scmp.eq.s32.totalorder %s40, 0
      %p93 = por %p91, %p92
      %s95 = sadd.s32 %s94, 1
      %p98 = scmp.eq.s32.totalorder %s34, 1
      %p99 = scmp.ne.s32.totalorder %s94, %s96
      %p100 = scmp.eq.s32.totalorder %s34, 0
      %p101 = por %p99, %p100
      %p102 = scmp.ne.s32.totalorder %s94, %s96
      %p103 = scmp.eq.s32.totalorder %s39, 1
      %p104 = por %p102, %p103
      %p105 = scmp.ne.s32.totalorder %s96, %s97
      %p106 = scmp.eq.s32.totalorder %s39, 0
      %p107 = por %p105, %p106
      %p108 = scmp.ne.s32.totalorder %s96, %s97
      %p109 = scmp.eq.s32.totalorder %s40, 1
      %p110 = por %p108, %p109
      %p112 = scmp.ne.s32.totalorder %s97, %s111
      %p113 = scmp.eq.s32.totalorder %s40, 0
      %p114 = por %p112, %p113
      %s116 = sadd.s32 %s115, 1
      %p119 = scmp.eq.s32.totalorder %s34, 1
      %p120 = scmp.ne.s32.totalorder %s115, %s117
      %p121 = scmp.eq.s32.totalorder %s34, 0
      %p122 = por %p120, %p121
      %p123 = scmp.ne.s32.totalorder %s115, %s117
      %p124 = scmp.eq.s32.totalorder %s39, 1
      %p125 = por %p123, %p124
      %p126 = scmp.ne.s32.totalorder %s117, %s118
      %p127 = scmp.eq.s32.totalorder %s39, 0
      %p128 = por %p126, %p127
      %p129 = scmp.ne.s32.totalorder %s117, %s118
      %p130 = scmp.eq.s32.totalorder %s40, 1
      %p131 = por %p129, %p130
      %p133 = scmp.ne.s32.totalorder %s118, %s132
      %p134 = scmp.eq.s32.totalorder %s40, 0
      %p135 = por %p133, %p134
      %s137 = sadd.s32 %s136, 1
      %p140 = scmp.eq.s32.totalorder %s34, 1
      %p141 = scmp.ne.s32.totalorder %s136, %s138
      %p142 = scmp.eq.s32.totalorder %s34, 0
      %p143 = por %p141, %p142
      %p144 = scmp.ne.s32.totalorder %s136, %s138
      %p145 = scmp.eq.s32.totalorder %s39, 1
      %p146 = por %p144, %p145
      %p147 = scmp.ne.s32.totalorder %s138, %s139
      %p148 = scmp.eq.s32.totalorder %s39, 0
      %p149 = por %p147, %p148
      %p150 = scmp.ne.s32.totalorder %s138, %s139
      %p151 = scmp.eq.s32.totalorder %s40, 1
      %p152 = por %p150, %p151
      %p154 = scmp.ne.s32.totalorder %s139, %s153
      %p155 = scmp.eq.s32.totalorder %s40, 0
      %p156 = por %p154, %p155
      %s158 = sadd.s32 %s157, 1
      %p161 = scmp.eq.s32.totalorder %s34, 1
      %p162 = scmp.ne.s32.totalorder %s157, %s159
      %p163 = scmp.eq.s32.totalorder %s34, 0
      %p164 = por %p162, %p163
      %p165 = scmp.ne.s32.totalorder %s157, %s159
      %p166 = scmp.eq.s32.totalorder %s39, 1
      %p167 = por %p165, %p166
      %p168 = scmp.ne.s32.totalorder %s159, %s160
      %p169 = scmp.eq.s32.totalorder %s39, 0
      %p170 = por %p168, %p169
      %p171 = scmp.ne.s32.totalorder %s159, %s160
      %p172 = scmp.eq.s32.totalorder %s40, 1
      %p173 = por %p171, %p172
      %p175 = scmp.ne.s32.totalorder %s160, %s174
      %p176 = scmp.eq.s32.totalorder %s40, 0
      %p177 = por %p175, %p176
      %s179 = sadd.s32 %s178, 1
      %p182 = scmp.eq.s32.totalorder %s34, 1
      %p183 = scmp.ne.s32.totalorder %s178, %s180
      %p184 = scmp.eq.s32.totalorder %s34, 0
      %p185 = por %p183, %p184
      %p186 = scmp.ne.s32.totalorder %s178, %s180
      %p187 = scmp.eq.s32.totalorder %s39, 1
      %p188 = por %p186, %p187
      %p189 = scmp.ne.s32.totalorder %s180, %s181
      %p190 = scmp.eq.s32.totalorder %s39, 0
      %p191 = por %p189, %p190
      %p192 = scmp.ne.s32.totalorder %s180, %s181
      %p193 = scmp.eq.s32.totalorder %s40, 1
      %p194 = por %p192, %p193
      %p196 = scmp.ne.s32.totalorder %s181, %s195
      %p197 = scmp.eq.s32.totalorder %s40, 0
      %p198 = por %p196, %p197
      %s200 = sadd.s32 %s199, 1
      %p203 = scmp.eq.s32.totalorder %s34, 1
      %p204 = scmp.ne.s32.totalorder %s199, %s201
      %p205 = scmp.eq.s32.totalorder %s34, 0
      %p206 = por %p204, %p205
      %p207 = scmp.ne.s32.totalorder %s199, %s201
      %p208 = scmp.eq.s32.totalorder %s39, 1
      %p209 = por %p207, %p208
      %p210 = scmp.ne.s32.totalorder %s201, %s202
      %p211 = scmp.eq.s32.totalorder %s39, 0
      %p212 = por %p210, %p211
      %p213 = scmp.ne.s32.totalorder %s201, %s202
      %p214 = scmp.eq.s32.totalorder %s40, 1
      %p215 = por %p213, %p214
      %p217 = scmp.ne.s32.totalorder %s202, %s216
      %p218 = scmp.eq.s32.totalorder %s40, 0
      %p219 = por %p217, %p218
      %s221 = sadd.s32 %s220, 1
      %p224 = scmp.eq.s32.totalorder %s34, 1
      %p225 = scmp.ne.s32.totalorder %s220, %s222
      %p226 = scmp.eq.s32.totalorder %s34, 0
      %p227 = por %p225, %p226
      %p228 = scmp.ne.s32.totalorder %s220, %s222
      %p229 = scmp.eq.s32.totalorder %s39, 1
      %p230 = por %p228, %p229
      %p231 = scmp.ne.s32.totalorder %s222, %s223
      %p232 = scmp.eq.s32.totalorder %s39, 0
      %p233 = por %p231, %p232
      %p234 = scmp.ne.s32.totalorder %s222, %s223
      %p235 = scmp.eq.s32.totalorder %s40, 1
      %p236 = por %p234, %p235
      %p238 = scmp.ne.s32.totalorder %s223, %s237
      %p239 = scmp.eq.s32.totalorder %s40, 0
      %p240 = por %p238, %p239
      %s241 = ssub.s32 %s34, %s41
      %p242 = scmp.eq.s32.totalorder %s241, 0
      %s244 = sadd.s32 %s243, 1
      %s245 = scalar_select %p242, %s243, %s244
      %p248 = pneg %p242
      %p249 = scmp.eq.s32.totalorder %s34, 1
      %p250 = por %p248, %p249
      %p251 = scmp.ne.s32.totalorder %s243, %s246
      %p252 = scmp.eq.s32.totalorder %s34, 0
      %p253 = por %p251, %p252
      %p254 = scmp.ne.s32.totalorder %s243, %s246
      %p255 = scmp.eq.s32.totalorder %s39, 1
      %p256 = por %p254, %p255
      %p257 = scmp.ne.s32.totalorder %s246, %s247
      %p258 = scmp.eq.s32.totalorder %s39, 0
      %p259 = por %p257, %p258
      %p260 = scmp.ne.s32.totalorder %s246, %s247
      %p261 = scmp.eq.s32.totalorder %s40, 1
      %p262 = por %p260, %p261
      %p264 = scmp.ne.s32.totalorder %s247, %s263
      %p265 = scmp.eq.s32.totalorder %s40, 0
      %p266 = por %p264, %p265
      %p267 = scmp.le.s32.totalorder 1, %s34
      %p268 = scmp.lt.s32.totalorder %s34, 3
      %p269 = pnand %p267, %p268
      %p270 = pneg %p269
      // Predicated region
      $region9: #{tpu_custom_call.1} parent=5 // pred_check
        _
      $region10: #{tpu_custom_call.1} parent=5 // pred_check_branch
        %272 = sbr.rel (%p269) target = $region12
      $region11: #{tpu_custom_call.1} parent=5 // pred_region
        %s273 = ssub.s32 %s34, 1
        // Predicated region
        $region13: #{tpu_custom_call.1} parent=11 // pred_check
          %p274 = pneg %p107
        $region14: #{tpu_custom_call.1} parent=11 // pred_check_branch
          %276 = sbr.rel (%p274) target = $region16
        $region15: #{tpu_custom_call.1} parent=11 // pred_region
          _
        $region16: #{tpu_custom_call.1} parent=11 // pred_fallthru
          _
        // Predicated region
        $region17: #{tpu_custom_call.1} parent=11 // pred_check
          %p277 = pneg %p128
        $region18: #{tpu_custom_call.1} parent=11 // pred_check_branch
          %279 = sbr.rel (%p277) target = $region20
        $region19: #{tpu_custom_call.1} parent=11 // pred_region
          _
        $region20: #{tpu_custom_call.1} parent=11 // pred_fallthru
          _
        // Predicated region
        $region21: #{tpu_custom_call.1} parent=11 // pred_check
          %p280 = pneg %p149
        $region22: #{tpu_custom_call.1} parent=11 // pred_check_branch
          %282 = sbr.rel (%p280) target = $region24
        $region23: #{tpu_custom_call.1} parent=11 // pred_region
          %284 = vsyncadd [#allocation8], 0
          %s285 = sshll.u32 %s5, 4
          %s286 = int_to_ptr.hbm [resolvable:$true] %s285
          %s287 = sshll.u32 [#allocation9], 4
          %s288 = int_to_ptr.vmem [resolvable:$true] %s287
          %293 = dma.hbm_to_vmem [thread:$0]  %s286, 256, %s288, [#allocation8], 64, 64, 4
        $region24: #{tpu_custom_call.1} parent=11 // pred_fallthru
          _
        // Predicated region
        $region25: #{tpu_custom_call.1} parent=11 // pred_check
          %p294 = pneg %p170
        $region26: #{tpu_custom_call.1} parent=11 // pred_check_branch
          %296 = sbr.rel (%p294) target = $region28
        $region27: #{tpu_custom_call.1} parent=11 // pred_region
          %298 = vsyncadd [#allocation11], 0
          %s299 = sshll.u32 %s6, 4
          %s300 = int_to_ptr.hbm [resolvable:$true] %s299
          %s301 = sshll.u32 [#allocation10], 4
          %s302 = int_to_ptr.vmem [resolvable:$true] %s301
          %307 = dma.hbm_to_vmem [thread:$0]  %s300, 512, %s302, [#allocation11], 128, 128, 8
        $region28: #{tpu_custom_call.1} parent=11 // pred_fallthru
          _
        // Predicated region
        $region29: #{tpu_custom_call.1} parent=11 // pred_check
          %p308 = pneg %p191
        $region30: #{tpu_custom_call.1} parent=11 // pred_check_branch
          %310 = sbr.rel (%p308) target = $region32
        $region31: #{tpu_custom_call.1} parent=11 // pred_region
          _
        $region32: #{tpu_custom_call.1} parent=11 // pred_fallthru
          _
        // Predicated region
        $region33: #{tpu_custom_call.1} parent=11 // pred_check
          %p311 = pneg %p212
        $region34: #{tpu_custom_call.1} parent=11 // pred_check_branch
          %313 = sbr.rel (%p311) target = $region36
        $region35: #{tpu_custom_call.1} parent=11 // pred_region
          _
        $region36: #{tpu_custom_call.1} parent=11 // pred_fallthru
          _
        // Predicated region
        $region37: #{tpu_custom_call.1} parent=11 // pred_check
          %p314 = pneg %p233
        $region38: #{tpu_custom_call.1} parent=11 // pred_check_branch
          %316 = sbr.rel (%p314) target = $region40
        $region39: #{tpu_custom_call.1} parent=11 // pred_region
          _
        $region40: #{tpu_custom_call.1} parent=11 // pred_fallthru
          _
      $region12: #{tpu_custom_call.1} parent=5 // pred_fallthru
        _
      %p317 = scmp.lt.s32.totalorder %s34, 2
      // Predicated region
      $region41: #{tpu_custom_call.1} parent=5 // pred_check
        %p318 = pneg %p317
      $region42: #{tpu_custom_call.1} parent=5 // pred_check_branch
        %320 = sbr.rel (%p318) target = $region44
      $region43: #{tpu_custom_call.1} parent=5 // pred_region
        // Predicated region
        $region45: #{tpu_custom_call.1} parent=43 // pred_check
          %p321 = pneg %p54
        $region46: #{tpu_custom_call.1} parent=43 // pred_check_branch
          %323 = sbr.rel (%p321) target = $region48
        $region47: #{tpu_custom_call.1} parent=43 // pred_region
          %s324 = sand.u32 %s44, 1
          %s325 = scalar_lea.sflag [#allocation5], %s324
          %s326 = sand.u32 %s44, 1
          %s327 = smul.addr %s326, 8
          %s328 = scalar_lea.vmem [#allocation4], %s327
          %330 = vsyncadd %s325, 0
          %s331 = smul.addr %s34, 8
          %s332 = scalar_lea.hbm %s1, %s331
          %s334 = sshll.u32 %s332, 4
          %s335 = int_to_ptr.hbm [resolvable:$true] %s334
          %s336 = sshll.u32 %s328, 4
          %s337 = int_to_ptr.vmem [resolvable:$true] %s336
          %339 = dma.hbm_to_vmem [thread:$0]  %s335, 128, %s337, %s325
        $region48: #{tpu_custom_call.1} parent=43 // pred_fallthru
          _
        // Predicated region
        $region49: #{tpu_custom_call.1} parent=43 // pred_check
          %p340 = pneg %p80
        $region50: #{tpu_custom_call.1} parent=43 // pred_check_branch
          %342 = sbr.rel (%p340) target = $region52
        $region51: #{tpu_custom_call.1} parent=43 // pred_region
          %s343 = sand.u32 %s34, 1
          %s344 = scalar_lea.sflag [#allocation8], %s343
          %s345 = sand.u32 %s70, 1
          %s346 = smul.addr %s345, 4
          %s347 = scalar_lea.vmem [#allocation7], %s346
          %349 = vsyncadd %s344, 0
          %s350 = smul.addr %s34, 4
          %s351 = scalar_lea.hbm %s2, %s350
          %s353 = sshll.u32 %s351, 4
          %s354 = int_to_ptr.hbm [resolvable:$true] %s353
          %s355 = sshll.u32 %s347, 4
          %s356 = int_to_ptr.vmem [resolvable:$true] %s355
          %358 = dma.hbm_to_vmem [thread:$0]  %s354, 64, %s356, %s344
        $region52: #{tpu_custom_call.1} parent=43 // pred_fallthru
          _
      $region44: #{tpu_custom_call.1} parent=5 // pred_fallthru
        _
      %p359 = scmp.le.s32.totalorder 1, %s34
      %p360 = scmp.lt.s32.totalorder %s34, 3
      %p361 = pnand %p359, %p360
      %p362 = pneg %p361
      // Predicated region
      $region53: #{tpu_custom_call.1} parent=5 // pred_check
        _
      $region54: #{tpu_custom_call.1} parent=5 // pred_check_branch
        %364 = sbr.rel (%p361) target = $region56
      $region55: #{tpu_custom_call.1} parent=5 // pred_region
        %s365 = ssub.s32 %s34, 1
        %s366 = sand.u32 %s47, 1
        %s367 = scalar_lea.sflag [#allocation5], %s366
        %s368 = sand.u32 %s47, 1
        %s369 = smul.addr %s368, 8
        %s370 = scalar_lea.vmem [#allocation4], %s369
        // Predicated region
        $region57: #{tpu_custom_call.1} parent=55 // pred_check
          %p371 = pneg %p60
        $region58: #{tpu_custom_call.1} parent=55 // pred_check_branch
          %373 = sbr.rel (%p371) target = $region60
        $region59: #{tpu_custom_call.1} parent=55 // pred_region
          %375 = dma.done %s367, 128
        $region60: #{tpu_custom_call.1} parent=55 // pred_fallthru
          _
        %s376 = sand.u32 %s39, 1
        %s377 = scalar_lea.sflag [#allocation8], %s376
        %s378 = sand.u32 %s73, 1
        %s379 = smul.addr %s378, 4
        %s380 = scalar_lea.vmem [#allocation7], %s379
        // Predicated region
        $region61: #{tpu_custom_call.1} parent=55 // pred_check
          %p381 = pneg %p86
        $region62: #{tpu_custom_call.1} parent=55 // pred_check_branch
          %383 = sbr.rel (%p381) target = $region64
        $region63: #{tpu_custom_call.1} parent=55 // pred_region
          %385 = dma.done %s377, 64
        $region64: #{tpu_custom_call.1} parent=55 // pred_fallthru
          _
        // Predicated region
        $region65: #{tpu_custom_call.1} parent=55 // pred_check
          %p386 = pneg %p149
        $region66: #{tpu_custom_call.1} parent=55 // pred_check_branch
          %388 = sbr.rel (%p386) target = $region68
        $region67: #{tpu_custom_call.1} parent=55 // pred_region
          %390 = dma.done [#allocation8], 256
        $region68: #{tpu_custom_call.1} parent=55 // pred_fallthru
          _
        // Predicated region
        $region69: #{tpu_custom_call.1} parent=55 // pred_check
          %p391 = pneg %p170
        $region70: #{tpu_custom_call.1} parent=55 // pred_check_branch
          %393 = sbr.rel (%p391) target = $region72
        $region71: #{tpu_custom_call.1} parent=55 // pred_region
          %395 = dma.done [#allocation11], 512
        $region72: #{tpu_custom_call.1} parent=55 // pred_fallthru
          _
        %s396 = sand.u32 %s47, 1
        %s397 = scalar_lea.sflag [#allocation5], %s396
        %s398 = sand.u32 %s47, 1
        %s399 = smul.addr %s398, 8
        %s400 = scalar_lea.vmem [#allocation4], %s399
        %p401 = pneg %p60
        %p402 = pneg %p57
        %s403 = sand.u32 %s39, 1
        %s404 = scalar_lea.sflag [#allocation8], %s403
        %s405 = sand.u32 %s73, 1
        %s406 = smul.addr %s405, 4
        %s407 = scalar_lea.vmem [#allocation7], %s406
        %p408 = pneg %p86
        %p409 = pneg %p83
        %p410 = pneg %p107
        %p411 = pneg %p104
        %p412 = pneg %p128
        %p413 = pneg %p125
        %p414 = pneg %p149
        %p415 = pneg %p146
        %p416 = pneg %p170
        %p417 = pneg %p167
        %p418 = pneg %p191
        %p419 = pneg %p188
        %p420 = pneg %p212
        %p421 = pneg %p209
        %p422 = pneg %p233
        %p423 = pneg %p230
        %p424 = pneg %p259
        %p425 = pneg %p256
        %s426 = sand.u32 %s246, 1
        %s427 = scalar_lea.sflag [#allocation6], %s426
        %s428 = sand.u32 %s246, 1
        %s429 = scalar_lea.vmem [#allocation12], %s428
        %v431 = vld [vmem:[%s370] sm:$0xff]
        %v432 = vld [vmem:[%s380] sm:$0xf]
        %v433 = vld [vmem:[%s3] sm:$0xf]
        %v434 = vld [vmem:[%s3 + $0x4] sm:$0xf]
        %v435 = vld [vmem:[%s3 + $0x8] sm:$0xf]
        %v436 = vld [vmem:[%s3 + $0xc] sm:$0xf]
        %v437 = vld [vmem:[%s3 + $0x10] sm:$0xf]
        %v438 = vld [vmem:[%s3 + $0x14] sm:$0xf]
        %v439 = vld [vmem:[%s3 + $0x18] sm:$0xf]
        %v440 = vld [vmem:[%s3 + $0x1c] sm:$0xf]
        %v441 = vld [vmem:[#allocation9] sm:$0xf]
        %v442 = vld [vmem:[#allocation9 + $0x4] sm:$0xf]
        %v443 = vld [vmem:[#allocation9 + $0x8] sm:$0xf]
        %v444 = vld [vmem:[#allocation9 + $0xc] sm:$0xf]
        %v445 = vld [vmem:[%s4] sm:$0x1]
        %v447 = vperm.slane %v445, 0
        %v449 = vpack.c.bf16 %v431, %v431
        %vm450 = vcmask 64512
        %v452 = vsel %vm450, %v432, 0
        %vm454 = vcmask 1043456
        %v456 = vsel %vm454, %v449, 0
        %458 = vmatpush.bf16.msra.mxu0 0
        %459 = vmatpush.bf16.msra.mxu0 0
        %460 = vmatpush.bf16.msra.mxu0 0
        %461 = vmatpush.bf16.msra.mxu0 0
        %462 = vmatpush.bf16.msra.mxu0 0
        %463 = vmatpush.bf16.msra.mxu0 0
        %464 = vmatpush.bf16.msra.mxu0 0
        %465 = vmatpush.bf16.msra.mxu0 %v456
        %466 = vmatmul.bf16.gmra.mxu0 %v452
        %v467 = vpop.f32.mrf.mxu0
        %v468 = vadd.f32 0.0, %v467
        %v469 = vpop.f32.mrf.mxu0
        %470 = vdwg.mxu0
        %v471 = vpack.c.bf16 %v468, %v468
        %v473 = vunpack.c.l.b16 %v449
        %v474 = vpack.c.b16 %v473, %v473
        %475 = vrot.lane.b32.xlu0 %v474, 32
        %v476 = vpop.permute.xlu0 %475
        %vm477 = vcmask 261120
        %v480 = vsel %vm477, %v471, %v476
        %v489 = vunpack.c.l.b16 %v433
        %v490 = vunpack.c.l.b16 %v434
        %v491 = vunpack.c.l.b16 %v435
        %v492 = vunpack.c.l.b16 %v436
        %v493 = vunpack.c.l.b16 %v437
        %v494 = vunpack.c.l.b16 %v438
        %v495 = vunpack.c.l.b16 %v439
        %v496 = vunpack.c.l.b16 %v440
        %v497 = vpack.c.b16 %v490, %v489
        %v498 = vpack.c.b16 %v492, %v491
        %v499 = vpack.c.b16 %v494, %v493
        %v500 = vpack.c.b16 %v496, %v495
        %vm505 = vcmask 523264
        %v506 = vsel %vm505, %v480, 0
        %508 = vmatpush.bf16.msra.mxu0 0
        %509 = vmatpush.bf16.msra.mxu0 0
        %510 = vmatpush.bf16.msra.mxu0 0
        %511 = vmatpush.bf16.msra.mxu0 0
        %512 = vmatpush.bf16.msra.mxu0 %v500
        %513 = vmatpush.bf16.msra.mxu0 %v499
        %514 = vmatpush.bf16.msra.mxu0 %v498
        %515 = vmatpush.bf16.msra.mxu0 %v497
        %516 = vmatmul.bf16.gmra.mxu0 %v506
        %v517 = vpop.f32.mrf.mxu0
        %v518 = vadd.f32 %v447, %v517
        %v519 = vpop.f32.mrf.mxu0
        %520 = vdwg.mxu0
        %v521 = vxor.u32 %v518, 2147483648
        %v522 = vmul.f32 %v521, 1.442695
        %v523 = vpow.pop %v522
        %v524 = vadd.f32 %v523, 1.0
        %v525 = vrcp.pop %v524
        %v526 = vmul.f32 %v524, %v525
        %v527 = vsub.f32 1.0, %v526
        %v528 = vmul.f32 %v525, %v527
        %v529 = vadd.f32 %v525, %v528
        %vm530 = vweird.f32 %v524
        %vm531 = vweird.f32 %v525
        %vm532 = vmor %vm530, %vm531
        %v533 = vsel %vm532, %v525, %v529
        %v534 = vand.u32 2147483647, %v524
        %vm535 = vcmp.eq.f32.partialorder %v534, 8.507059e+37
        %v536 = vand.u32 %v524, 2147483648
        %v537 = vor.u32 1.1754944e-38, %v536
        %v538 = vsel %vm535, %v537, %v533
        %v539 = vmul.f32 1.0, %v538
        %541 = vrot.lane.b32.xlu0 %v539, 96
        %v542 = vpop.permute.xlu0 %541
        %v544 = vmul.f32 %v431, %v542
        %v545 = vpack.c.bf16 %v544, %v544
        %v550 = vunpack.c.l.b16 %v441
        %v551 = vunpack.c.l.b16 %v442
        %v552 = vunpack.c.l.b16 %v443
        %v553 = vunpack.c.l.b16 %v444
        %v554 = vpack.c.b16 %v551, %v550
        %v555 = vpack.c.b16 %v553, %v552
        %v559 = vsel %vm477, %v545, 0
        %561 = vmatpush.bf16.msra.mxu0 0
        %562 = vmatpush.bf16.msra.mxu0 0
        %563 = vmatpush.bf16.msra.mxu0 0
        %564 = vmatpush.bf16.msra.mxu0 0
        %565 = vmatpush.bf16.msra.mxu0 0
        %566 = vmatpush.bf16.msra.mxu0 0
        %567 = vmatpush.bf16.msra.mxu0 %v555
        %568 = vmatpush.bf16.msra.mxu0 %v554
        %569 = vmatmul.bf16.gmra.mxu0 %v559
        %v570 = vpop.f32.mrf.mxu0
        %v571 = vadd.f32 0.0, %v570
        %v572 = vpop.f32.mrf.mxu0
        %573 = vdwg.mxu0
        %575 = vrot.lane.b32.xlu0 %v571, 64
        %v576 = vpop.permute.xlu0 %575
        %v578 = vadd.f32 %v518, %v576
        %v579 = vtanh.pop %v578
        %580 = vrot.lane.b32.xlu0 %v539, 64
        %v581 = vpop.permute.xlu0 %580
        %v583 = vmul.f32 %v579, %v581
        %v584 = vsub.f32 1.0, %v539
        %v585 = vmul.f32 %v431, %v584
        %587 = vrot.lane.b32.xlu0 %v585, 64
        %v588 = vpop.permute.xlu0 %587
        %v590 = vadd.f32 %v583, %v588
        %v591 = vpack.c.bf16 %v590, %v590
        %v593 = vunpack.c.l.b16 %v591
        %v594 = vpack.c.b16 %v593, %v593
        %595 = vrot.lane.b32.xlu0 %v594, 64
        %v596 = vpop.permute.xlu0 %595
        %v598 = vsel %vm454, %v596, 0
        %600 = vmatpush.bf16.msra.mxu0 0
        %601 = vmatpush.bf16.msra.mxu0 0
        %602 = vmatpush.bf16.msra.mxu0 0
        %603 = vmatpush.bf16.msra.mxu0 0
        %604 = vmatpush.bf16.msra.mxu0 0
        %605 = vmatpush.bf16.msra.mxu0 0
        %606 = vmatpush.bf16.msra.mxu0 0
        %607 = vmatpush.bf16.msra.mxu0 %v598
        %608 = vmatmul.bf16.gmra.mxu0 %v452
        %v609 = vpop.f32.mrf.mxu0
        %v610 = vadd.f32 0.0, %v609
        %v611 = vpop.f32.mrf.mxu0
        %612 = vdwg.mxu0
        %v613 = vpack.c.bf16 %v610, %v610
        %614 = vrot.lane.b32.xlu0 %v594, 96
        %v615 = vpop.permute.xlu0 %614
        %v618 = vsel %vm477, %v613, %v615
        %v619 = vsel %vm505, %v618, 0
        %621 = vmatpush.bf16.msra.mxu0 0
        %622 = vmatpush.bf16.msra.mxu0 0
        %623 = vmatpush.bf16.msra.mxu0 0
        %624 = vmatpush.bf16.msra.mxu0 0
        %625 = vmatpush.bf16.msra.mxu0 %v500
        %626 = vmatpush.bf16.msra.mxu0 %v499
        %627 = vmatpush.bf16.msra.mxu0 %v498
        %628 = vmatpush.bf16.msra.mxu0 %v497
        %629 = vmatmul.bf16.gmra.mxu0 %v619
        %v630 = vpop.f32.mrf.mxu0
        %v631 = vadd.f32 %v447, %v630
        %v632 = vpop.f32.mrf.mxu0
        %633 = vdwg.mxu0
        %v634 = vxor.u32 %v631, 2147483648
        %v635 = vmul.f32 %v634, 1.442695
        %v636 = vpow.pop %v635
        %v637 = vadd.f32 %v636, 1.0
        %v638 = vrcp.pop %v637
        %v639 = vmul.f32 %v637, %v638
        %v640 = vsub.f32 1.0, %v639
        %v641 = vmul.f32 %v638, %v640
        %v642 = vadd.f32 %v638, %v641
        %vm643 = vweird.f32 %v637
        %vm644 = vweird.f32 %v638
        %vm645 = vmor %vm643, %vm644
        %v646 = vsel %vm645, %v638, %v642
        %v647 = vand.u32 2147483647, %v637
        %vm648 = vcmp.eq.f32.partialorder %v647, 8.507059e+37
        %v649 = vand.u32 %v637, 2147483648
        %v650 = vor.u32 1.1754944e-38, %v649
        %v651 = vsel %vm648, %v650, %v646
        %v652 = vmul.f32 1.0, %v651
        %654 = vrot.lane.b32.xlu0 %v652, 32
        %v655 = vpop.permute.xlu0 %654
        %v657 = vmul.f32 %v590, %v655
        %v658 = vpack.c.bf16 %v657, %v657
        %660 = vrot.lane.b32.xlu0 %v658, 64
        %v661 = vpop.permute.xlu0 %660
        %v663 = vsel %vm477, %v661, 0
        %665 = vmatpush.bf16.msra.mxu0 0
        %666 = vmatpush.bf16.msra.mxu0 0
        %667 = vmatpush.bf16.msra.mxu0 0
        %668 = vmatpush.bf16.msra.mxu0 0
        %669 = vmatpush.bf16.msra.mxu0 0
        %670 = vmatpush.bf16.msra.mxu0 0
        %671 = vmatpush.bf16.msra.mxu0 %v555
        %672 = vmatpush.bf16.msra.mxu0 %v554
        %673 = vmatmul.bf16.gmra.mxu0 %v663
        %v674 = vpop.f32.mrf.mxu0
        %v675 = vadd.f32 0.0, %v674
        %v676 = vpop.f32.mrf.mxu0
        %677 = vdwg.mxu0
        %679 = vrot.lane.b32.xlu0 %v675, 64
        %v680 = vpop.permute.xlu0 %679
        %v682 = vadd.f32 %v631, %v680
        %v683 = vtanh.pop %v682
        %684 = vrot.lane.b32.xlu0 %v652, 64
        %v685 = vpop.permute.xlu0 %684
        %v687 = vmul.f32 %v683, %v685
        %v688 = vsub.f32 1.0, %v652
        %690 = vrot.lane.b32.xlu0 %v688, 64
        %v691 = vpop.permute.xlu0 %690
        %v693 = vmul.f32 %v590, %v691
        %v694 = vadd.f32 %v687, %v693
        %v695 = vld [vmem:[#allocation10] sm:$0xff]
        %v696 = vld [vmem:[#allocation10 + $0x8] sm:$0xff]
        %v697 = vld [vmem:[#allocation10 + $0x10] sm:$0xff]
        %v698 = vld [vmem:[#allocation10 + $0x18] sm:$0xff]
        %v699 = vld [vmem:[%s7] sm:$0x1]
        %v701 = vperm.slane %v699, 0
        %704 = vrot.lane.b32.xlu0 %v694, 64
        %v705 = vpop.permute.xlu0 %704
        %v706 = vsel %vm477, %v705, 0
        %708 = vmatpush.msra.mxu0 0.0
        %709 = vmatpush.msra.mxu0 0.0
        %710 = vmatpush.msra.mxu0 0.0
        %711 = vmatpush.msra.mxu0 0.0
        %712 = vmatpush.msra.mxu0 0.0
        %713 = vmatpush.msra.mxu0 0.0
        %714 = vmatpush.msra.mxu0 0.0
        %715 = vmatpush.msra.mxu0 0.0
        %716 = vmatpush.msra.mxu0 0.0
        %717 = vmatpush.msra.mxu0 0.0
        %718 = vmatpush.msra.mxu0 0.0
        %719 = vmatpush.msra.mxu0 0.0
        %720 = vmatpush.msra.mxu0 %v698
        %721 = vmatpush.msra.mxu0 %v697
        %722 = vmatpush.msra.mxu0 %v696
        %723 = vmatpush.msra.mxu0 %v695
        %724 = vmatmul.f32.gmra.mxu0 %v706
        %v725 = vpop.f32.mrf.mxu0
        %v726 = vadd.f32 %v701, %v725
        %727 = vdwg.mxu0
        %v728 = vxor.u32 %v726, 2147483648
        %v729 = vmul.f32 %v728, 1.442695
        %v730 = vpow.pop %v729
        %v731 = vadd.f32 %v730, 1.0
        %v732 = vrcp.pop %v731
        %v733 = vmul.f32 %v731, %v732
        %v734 = vsub.f32 1.0, %v733
        %v735 = vmul.f32 %v732, %v734
        %v736 = vadd.f32 %v732, %v735
        %vm737 = vweird.f32 %v731
        %vm738 = vweird.f32 %v732
        %vm739 = vmor %vm737, %vm738
        %v740 = vsel %vm739, %v732, %v736
        %v741 = vand.u32 2147483647, %v731
        %vm742 = vcmp.eq.f32.partialorder %v741, 8.507059e+37
        %v743 = vand.u32 %v731, 2147483648
        %v744 = vor.u32 1.1754944e-38, %v743
        %v745 = vsel %vm742, %v744, %v740
        %v746 = vmul.f32 1.0, %v745
        %v747 = vtanh.pop %v726
        %749 = vset.pattern.permute.xlu0 0
        %750 = vperm.xlu0 %749, %v746
        %v751 = vpop.permute.xlu0 %750
        %v753 = vmul.f32 %v751, %v747
        %s754 = sld [smem:[#allocation3 + %s39]]
        %v755 = vlaneseq
        %v756 = vshrl.u32 %v755, 7
        %v757 = vstv %s754
        %vm758 = vcmp.lt.s32.totalorder %v756, %v757
        %v759 = vsel %vm758, 1, 0
        %v760 = vcvt.s32.f32 %v759
        %v761 = vsel %vm758, %v753, -1e+09
        %vm762 = vcmask 269320
        %v763 = vsel %vm762, %v761, -inf
        %v764 = vrot.slane %v763, 4
        %v765 = vmax.f32 %v763, %v764
        %v766 = vrot.slane %v765, 2
        %v767 = vmax.f32 %v765, %v766
        %v768 = vrot.slane %v767, 1
        %v769 = vmax.f32 %v767, %v768
        %v770 = vrot.slane %v760, 4
        %v771 = vadd.f32 %v760, %v770
        %v772 = vrot.slane %v771, 2
        %v773 = vadd.f32 %v771, %v772
        %v774 = vrot.slane %v773, 1
        %v775 = vadd.f32 %v773, %v774
        %v776 = vmax.f32 %v775, 1.0
        %v777 = vmul.f32 %v753, %v760
        %v778 = vsel %vm762, %v777, 0.0
        %v779 = vrot.slane %v778, 4
        %v780 = vadd.f32 %v778, %v779
        %v781 = vrot.slane %v780, 2
        %v782 = vadd.f32 %v780, %v781
        %v783 = vrot.slane %v782, 1
        %v784 = vadd.f32 %v782, %v783
        %v785 = vrcp.pop %v776
        %v786 = vmul.f32 %v776, %v785
        %v787 = vsub.f32 1.0, %v786
        %v788 = vmul.f32 %v785, %v787
        %v789 = vadd.f32 %v785, %v788
        %vm790 = vweird.f32 %v776
        %vm791 = vweird.f32 %v785
        %vm792 = vmor %vm790, %vm791
        %v793 = vsel %vm792, %v785, %v789
        %v794 = vand.u32 2147483647, %v776
        %vm795 = vcmp.eq.f32.partialorder %v794, 8.507059e+37
        %v796 = vand.u32 %v776, 2147483648
        %v797 = vor.u32 1.1754944e-38, %v796
        %v798 = vsel %vm795, %v797, %v793
        %v799 = vmul.f32 %v784, %v798
        %v800 = vadd.f32 %v769, %v799
        %v801 = vld [vmem:[%s8] sm:$0xff]
        %v802 = vld [vmem:[%s8 + $0x8] sm:$0xff]
        %v803 = vld [vmem:[%s8 + $0x10] sm:$0xff]
        %v804 = vld [vmem:[%s8 + $0x18] sm:$0xff]
        %v805 = vld [vmem:[%s9] sm:$0x1]
        %807 = vrot.lane.b32.xlu0 %v800, 127
        %v808 = vpop.permute.xlu0 %807
        %v809 = vsel %vm477, %v808, 0
        %811 = vmatpush.msra.mxu0 0.0
        %812 = vmatpush.msra.mxu0 0.0
        %813 = vmatpush.msra.mxu0 0.0
        %814 = vmatpush.msra.mxu0 0.0
        %815 = vmatpush.msra.mxu0 0.0
        %816 = vmatpush.msra.mxu0 0.0
        %817 = vmatpush.msra.mxu0 0.0
        %818 = vmatpush.msra.mxu0 0.0
        %819 = vmatpush.msra.mxu0 0.0
        %820 = vmatpush.msra.mxu0 0.0
        %821 = vmatpush.msra.mxu0 0.0
        %822 = vmatpush.msra.mxu0 0.0
        %823 = vmatpush.msra.mxu0 %v804
        %824 = vmatpush.msra.mxu0 %v803
        %825 = vmatpush.msra.mxu0 %v802
        %826 = vmatpush.msra.mxu0 %v801
        %827 = vmatmul.f32.gmra.mxu0 %v809
        %v828 = vpop.f32.mrf.mxu0
        %v829 = vadd.f32 %v805, %v828
        %830 = vdwg.mxu0
        %vm831 = vcmask 24576
        %832 = vst.msk [vmem:[%s429] sm:$0x1] %vm831, %v829
        %s833 = sand.u32 %s246, 1
        %s834 = scalar_lea.sflag [#allocation6], %s833
        %s835 = sand.u32 %s246, 1
        %s836 = scalar_lea.vmem [#allocation12], %s835
        // Predicated region
        $region73: #{tpu_custom_call.1} parent=55 // pred_check
          %p837 = pneg %p256
        $region74: #{tpu_custom_call.1} parent=55 // pred_check_branch
          %839 = sbr.rel (%p837) target = $region76
        $region75: #{tpu_custom_call.1} parent=55 // pred_region
          %841 = vsyncadd %s834, 0
          %s842 = scalar_lea.hbm %s10, %s39
          %s844 = sshll.u32 %s836, 4
          %s845 = int_to_ptr.vmem [resolvable:$true] %s844
          %s846 = sshll.u32 %s842, 4
          %s847 = int_to_ptr.hbm [resolvable:$true] %s846
          %849 = dma.vmem_to_hbm [thread:$0]  %s845, 16, %s847, %s834
        $region76: #{tpu_custom_call.1} parent=55 // pred_fallthru
          _
      $region56: #{tpu_custom_call.1} parent=5 // pred_fallthru
        _
      %p850 = scmp.le.s32.totalorder 2, %s34
      // Predicated region
      $region77: #{tpu_custom_call.1} parent=5 // pred_check
        %p851 = pneg %p850
      $region78: #{tpu_custom_call.1} parent=5 // pred_check_branch
        %853 = sbr.rel (%p851) target = $region80
      $region79: #{tpu_custom_call.1} parent=5 // pred_region
        %s854 = ssub.s32 %s34, 2
        // Predicated region
        $region81: #{tpu_custom_call.1} parent=79 // pred_check
          %p855 = pneg %p262
        $region82: #{tpu_custom_call.1} parent=79 // pred_check_branch
          %857 = sbr.rel (%p855) target = $region84
        $region83: #{tpu_custom_call.1} parent=79 // pred_region
          %s858 = sand.u32 %s247, 1
          %s859 = scalar_lea.sflag [#allocation6], %s858
          %s860 = sand.u32 %s247, 1
          %s861 = scalar_lea.vmem [#allocation12], %s860
          %863 = dma.done %s859, 16
        $region84: #{tpu_custom_call.1} parent=79 // pred_fallthru
          _
      $region80: #{tpu_custom_call.1} parent=5 // pred_fallthru
        _
    $region6: #{tpu_custom_call.1} parent=1 // loop_footer
      %s38 = sadd.s32 1, %s34
    $region7: #{tpu_custom_call.1} parent=1 // loop_footer_branch
      %33 = sbr.rel target = $region3
    $region8: #{tpu_custom_call.1} parent=1 // loop_exit
      _
    %864 = vsyncpa [#allocation5], 1
    %s865 = scalar_lea.sflag [#allocation5], 1
    %866 = vsyncpa %s865, 1
    %867 = vsyncpa [#allocation8], 1
    %s868 = scalar_lea.sflag [#allocation8], 1
    %869 = vsyncpa %s868, 1
    %870 = vsyncpa [#allocation11], 1
    %871 = vsyncpa [#allocation6], 1
    %s872 = scalar_lea.sflag [#allocation6], 1
    %873 = vsyncpa %s872, 1

</llo_original>
